<compile_context>
chip_gen: v7x
topology: tpu7x:2x2x1
jax: 0.10.0
libtpu: 0.0.40
codegen_flags: <defaults>
</compile_context>

<pallas_src>
import math

import jax
import jax.numpy as jnp
from jax.experimental import pallas as pl
from jax.experimental.pallas import tpu as pltpu


def make_sinusoidal_pe(d_model: int, max_len: int = 5000) -> jnp.ndarray:
    """Deterministic buffer init, identical math to the PyTorch __init__.

    Returns pe with shape (1, max_len, d_model), float32.
    """
    position = jnp.arange(0, max_len, dtype=jnp.float32)[:, None]            # (max_len, 1)
    div_term = jnp.exp(
        jnp.arange(0, d_model, 2, dtype=jnp.float32) * -(math.log(10000.0) / d_model)
    )                                                                         # (d_model/2,)
    ang = position * div_term                                                 # (max_len, d_model/2)
    pe = jnp.zeros((max_len, d_model), dtype=jnp.float32)
    pe = pe.at[:, 0::2].set(jnp.sin(ang))
    pe = pe.at[:, 1::2].set(jnp.cos(ang))
    return pe[None]                                                           # (1, max_len, d_model)


def _pe_add_kernel(x_ref, pe_ref, o_ref):
    # x_ref: (TB, tc), pe_ref: (1, tc).  jnp broadcasting handles the batch rows;
    # jnp type promotion (e.g. bf16 x + f32 pe -> f32) matches the PyTorch forward.
    o_ref[...] = (x_ref[...] + pe_ref[...]).astype(o_ref.dtype)


def _round_up(n: int, m: int) -> int:
    return -(-n // m) * m


def _sublane_pack(dtype) -> int:
    """Rows occupied per 32-bit sublane tile for this dtype (f32->8, bf16->16, i8->32)."""
    return max(8, 32 // jnp.dtype(dtype).itemsize)


def _choose_tiles(B: int, flat_len: int, x_dtype, pe_dtype, out_dtype,
                  pipeline_budget_bytes: int, x_tile_cap_bytes: int):
    """Pick (TB rows, tc lanes).  tc is a multiple of 128 that divides flat_len exactly.

    The VMEM footprint model includes sublane padding for every block and assumes the
    default double-buffered pipeline: 2 * (x_block + out_block + pe_block).
    """
    x_b = jnp.dtype(x_dtype).itemsize
    pe_b = jnp.dtype(pe_dtype).itemsize
    out_b = jnp.dtype(out_dtype).itemsize
    px, ppe, pout = _sublane_pack(x_dtype), _sublane_pack(pe_dtype), _sublane_pack(out_dtype)
    row_pack = max(px, pout)

    def footprint(tb, tc):
        xb = _round_up(tb, px) * tc * x_b
        ob = _round_up(tb, pout) * tc * out_b
        peb = _round_up(1, ppe) * tc * pe_b
        return 2 * (xb + ob + peb)          # double-buffered input/output/pe blocks

    def fits(tb, tc):
        return (footprint(tb, tc) <= pipeline_budget_bytes
                and _round_up(tb, px) * tc * x_b <= x_tile_cap_bytes)

    n128 = flat_len // 128
    tc_target = 128 * max(1, min(n128, 8))  # aim for >= 1024-wide rows (or the full row)

    # --- batch-tile rows (TB) ---
    if fits(B, tc_target):
        tb = B                               # whole batch per block: minimal PE traffic
    else:
        tb = min(B, row_pack)
        t = row_pack
        while t * 2 <= B and fits(t * 2, tc_target):
            t *= 2
            tb = t

    # --- lane chunk (tc): largest multiple of 128 dividing flat_len that fits budget ---
    rows_padded = _round_up(tb, px)
    cap_m = max(1, min(n128, x_tile_cap_bytes // max(1, rows_padded * x_b * 128)))
    tc = 128
    for m in range(cap_m, 0, -1):
        c = m * 128
        if flat_len % c == 0 and fits(tb, c):
            tc = c
            break

    # --- v7x megacore: a "large" single-tile problem must have >= 2 grid steps ---
    nc = flat_len // tc
    nb = -(-B // tb)
    if nc * nb == 1 and B * flat_len * x_b >= (2 << 20) and n128 >= 2:
        for m in range(n128 // 2, 0, -1):
            c = m * 128
            if flat_len % c == 0:
                tc = c
                break

    return tb, tc


def positional_encoding_forward(x: jnp.ndarray, pe: jnp.ndarray) -> jnp.ndarray:
    """x: (B, S, D); pe: (1, max_len, D) float32 buffer. Returns x + pe[:, :S]."""
    B, S, D = x.shape
    _, max_len, D_pe = pe.shape
    assert D_pe == D, f"d_model mismatch: x has {D}, pe has {D_pe}"
    assert S <= max_len, f"sequence length {S} exceeds max_len {max_len}"

    # Match PyTorch promotion semantics: (bf16 x + f32 buffer) -> f32 output.
    out_dtype = jnp.promote_types(x.dtype, pe.dtype)

    flat_len = S * D
    # Contiguous minor-dim merges -> bitcasts, no HBM copy.  D is the shared minor dim,
    # so flat offsets into pe_flat line up with flat offsets into x2 for the first S rows.
    x2 = x.reshape(B, flat_len)
    pe_flat = pe.reshape(1, max_len * D)     # NOTE: no dtype cast of the full buffer here.

    # Generation-aware VMEM budgets.
    try:
        info = pltpu.get_tpu_info()
        phys_vmem = int(getattr(info, "vmem_capacity_bytes", 64 * 1024 * 1024))
    except Exception:
        phys_vmem = 64 * 1024 * 1024
    if phys_vmem >= 96 * 1024 * 1024:        # v5e / v6e: 128 MiB physical VMEM
        vmem_limit = 64 * 1024 * 1024
        x_tile_cap = 8 * 1024 * 1024
    else:                                    # v7x: 64 MiB physical VMEM per TC
        vmem_limit = 48 * 1024 * 1024
        x_tile_cap = 5 * 1024 * 1024
    pipeline_budget = vmem_limit - 4 * 1024 * 1024   # headroom for compiler scratch

    if flat_len >= 128 and flat_len % 128 == 0:
        # Fast path: lane-dense chunks taken straight from the full PE buffer.
        tb, tc = _choose_tiles(B, flat_len, x.dtype, pe_flat.dtype, out_dtype,
                               pipeline_budget, x_tile_cap)
        pe_use = pe_flat
    else:
        # Odd/tiny shapes: single full-extent block; slice PE so block == full dims.
        tb, tc = B, flat_len
        pe_use = jax.lax.slice(pe_flat, (0, 0), (1, flat_len))

    nc = pl.cdiv(flat_len, tc)
    nb = pl.cdiv(B, tb)

    out2 = pl.pallas_call(
        _pe_add_kernel,
        out_shape=jax.ShapeDtypeStruct((B, flat_len), out_dtype),
        grid_spec=pltpu.PrefetchScalarGridSpec(
            num_scalar_prefetch=0,
            # Chunk axis outermost: the pe block index is constant across the inner batch
            # axis, so its DMA is elided/minimal even when the batch is tiled.
            grid=(nc, nb),
            in_specs=[
                pl.BlockSpec((tb, tc), lambda c, b: (b, c)),   # x rows of one chunk
                pl.BlockSpec((1, tc), lambda c, b: (0, c)),    # matching PE chunk
            ],
            out_specs=pl.BlockSpec((tb, tc), lambda c, b: (b, c)),
        ),
        compiler_params=pltpu.CompilerParams(
            dimension_semantics=("parallel", "parallel"),   # lets v7x's 2 TCs split work
            vmem_limit_bytes=vmem_limit,
        ),
    )(x2, pe_use)

    return out2.reshape(B, S, D)


if __name__ == "__main__":
    d_model = 32
    max_len = 64        # small max_len for the synthetic test; semantics identical
    batch = 2
    seq = 8

    pe = make_sinusoidal_pe(d_model, max_len)

    key = jax.random.PRNGKey(0)
    x = jax.random.normal(key, (batch, seq, d_model), dtype=jnp.float32)

    out = positional_encoding_forward(x, pe)
    out = jax.block_until_ready(out)

    # Reference check against plain-JAX semantics of the PyTorch forward.
    ref = x + pe[:, :seq]
    assert out.shape == (batch, seq, d_model)
    assert out.dtype == ref.dtype
    assert jnp.allclose(out, ref, atol=1e-6), "mismatch vs reference"

    print("KERNEL_OK")
</pallas_src>

<mosaic_0001>
module attributes {stable_mosaic.version = 11 : i64} {
  func.func @_pe_add_kernel(%arg0: i32, %arg1: i32, %arg2: memref<2x256xf32, #tpu.memory_space<vmem>>, %arg3: memref<1x256xf32, #tpu.memory_space<vmem>>, %arg4: memref<2x256xf32, #tpu.memory_space<vmem>>) attributes {dimension_semantics = [#tpu.dimension_semantics<parallel>, #tpu.dimension_semantics<parallel>], iteration_bounds = array<i64: 1, 1>, scalar_prefetch = 0 : i64, scratch_operands = 0 : i64, tpu.core_type = #tpu.core_type<tc>, window_params = [{transform_indices = @transform_0, window_bounds = array<i64: 2, 256>}, {transform_indices = @transform_1, window_bounds = array<i64: 1, 256>}, {transform_indices = @transform_2, window_bounds = array<i64: 2, 256>}]} {
    %c0 = arith.constant 0 : index
    %c0_0 = arith.constant 0 : index
    %0 = vector.load %arg2[%c0, %c0_0] : memref<2x256xf32, #tpu.memory_space<vmem>>, vector<2x256xf32>
    %c0_1 = arith.constant 0 : index
    %c0_2 = arith.constant 0 : index
    %1 = vector.load %arg3[%c0_1, %c0_2] : memref<1x256xf32, #tpu.memory_space<vmem>>, vector<1x256xf32>
    %2 = vector.broadcast %1 : vector<1x256xf32> to vector<2x256xf32>
    %3 = arith.addf %0, %2 : vector<2x256xf32>
    %c0_3 = arith.constant 0 : index
    %c0_4 = arith.constant 0 : index
    %4 = vector.load %arg4[%c0_3, %c0_4] : memref<2x256xf32, #tpu.memory_space<vmem>>, vector<2x256xf32>
    tpu.vector_store %arg4[%c0_3, %c0_4], %3 {strides = array<i32>} : memref<2x256xf32, #tpu.memory_space<vmem>>, vector<2x256xf32>,
    return
  }
  func.func @transform_0(%arg0: i32, %arg1: i32) -> (i32, i32) {
    %c0_i32 = arith.constant 0 : i32
    return %arg1, %arg0 : i32, i32
  }
  func.func @transform_1(%arg0: i32, %arg1: i32) -> (i32, i32) {
    %c0_i32 = arith.constant 0 : i32
    %c0_i32_0 = arith.constant 0 : i32
    return %c0_i32, %arg0 : i32, i32
  }
  func.func @transform_2(%arg0: i32, %arg1: i32) -> (i32, i32) {
    %c0_i32 = arith.constant 0 : i32
    return %arg1, %arg0 : i32, i32
  }
}

</mosaic_0001>

<llo_original>
// kernel: tpu_custom_call.1
$region0: #{tpu_custom_call.1}
  #allocation0 [shape = 'u32[]', space=smem, size = 0x4, offset = 0x4, fixed_abs, tag = 'smem constant byte address 0x4 - core index']
  #allocation1 [shape = 'u32[144,128]{1,0:T(1,128)}', space=vmem, size = 0x12000, scoped, tag = 'internal scratch']
  %s0 = inlined_call_operand.hbm [shape: f32[2,256], index: 0, kind: input, shape index: {}]
  %s1 = inlined_call_operand.hbm [shape: f32[1,2048], index: 1, kind: input, shape index: {}]
  %s2 = inlined_call_operand.hbm [shape: f32[2,256], index: 2, kind: output, shape index: {}]
  %s3 = sld [smem:[#allocation0]]
  $region26: #{tpu_custom_call.1} parent=0
    _
  %s5 = ssub.s32 1, %s3
  %s6 = scalar_select 0, %s5, %s3
  $region1: #{tpu_custom_call.1} parent=0
    #allocation2 [shape = 'u8[2048]{0}', space=vmem, size = 0x800, scoped, tag = 'input window, operand 0, single buffered']
    #allocation3 [shape = 's32[1]{0}', space=sflag, size = 0x4, scoped, tag = 'scoped memory for tpu_custom_call.1']
    #allocation4 [shape = 's32[1]{0}', space=sflag, size = 0x4, scoped, tag = 'scoped memory for tpu_custom_call.1']
    #allocation5 [shape = 'u8[1024]{0}', space=vmem, size = 0x400, scoped, tag = 'input window, operand 1, single buffered']
    #allocation6 [shape = 's32[1]{0}', space=sflag, size = 0x4, scoped, tag = 'scoped memory for tpu_custom_call.1']
    #allocation7 [shape = 'u8[2048]{0}', space=vmem, size = 0x800, scoped, tag = 'output window, operand 0, single buffered']
    %7 = vsyncpa [#allocation3], 0
    %8 = vsyncpa [#allocation6], 0
    %9 = vsyncpa [#allocation4], 0
    // Predicated region
    $region2: #{tpu_custom_call.1} parent=1 // pred_check
      _
    $region3: #{tpu_custom_call.1} parent=1 // pred_check_branch
      %11 = sbr.rel (0) target = $region5
    $region4: #{tpu_custom_call.1} parent=1 // pred_region
      %s13 = ssub.s32 64, 64
      %14 = vsyncadd [#allocation3], %s13
      %s16 = sshll.u32 [#allocation2], 4
      %s17 = int_to_ptr.vmem [resolvable:$true] %s16
      %19 = dma.hbm_to_vmem [thread:$0]  %s0, 64, %s17, [#allocation3]
    $region5: #{tpu_custom_call.1} parent=1 // pred_fallthru
      _
    // Predicated region
    $region6: #{tpu_custom_call.1} parent=1 // pred_check
      _
    $region7: #{tpu_custom_call.1} parent=1 // pred_check_branch
      %21 = sbr.rel (0) target = $region9
    $region8: #{tpu_custom_call.1} parent=1 // pred_region
      %s23 = ssub.s32 32, 32
      %24 = vsyncadd [#allocation6], %s23
      %s26 = sshll.u32 [#allocation5], 4
      %s27 = int_to_ptr.vmem [resolvable:$true] %s26
      %29 = dma.hbm_to_vmem [thread:$0]  %s1, 32, %s27, [#allocation6]
    $region9: #{tpu_custom_call.1} parent=1 // pred_fallthru
      _
    // Predicated region
    $region10: #{tpu_custom_call.1} parent=1 // pred_check
      _
    $region11: #{tpu_custom_call.1} parent=1 // pred_check_branch
      %31 = sbr.rel (0) target = $region13
    $region12: #{tpu_custom_call.1} parent=1 // pred_region
      %32 = dma.done [#allocation3], 64
    $region13: #{tpu_custom_call.1} parent=1 // pred_fallthru
      _
    // Predicated region
    $region14: #{tpu_custom_call.1} parent=1 // pred_check
      _
    $region15: #{tpu_custom_call.1} parent=1 // pred_check_branch
      %34 = sbr.rel (0) target = $region17
    $region16: #{tpu_custom_call.1} parent=1 // pred_region
      %35 = dma.done [#allocation6], 32
    $region17: #{tpu_custom_call.1} parent=1 // pred_fallthru
      _
    %v36 = vld [vmem:[#allocation2] sm:$0xf]
    %v37 = vld [vmem:[#allocation5] sm:$0x3]
    %v39 = vlaneseq
    %v40 = vshrl.u32 %v39, 7
    %v41 = vsub.s32 0, %v40
    %v42 = vrot.slane %v37, %v41
    %v43 = vlaneseq
    %v44 = vshrl.u32 %v43, 7
    %v45 = vsub.s32 1, %v44
    %v46 = vrot.slane %v37, %v45
    %v47 = vcombine.low %v42, %v46
    %v49 = vunpack.c.l.s4 1983009808
    %v50 = vunpack.c.0.s8 %v49
    %v51 = vlaneseq
    %v52 = vshrl.u32 %v51, 7
    %v53 = vsub.s32 %v50, %v52
    %v54 = vrot.slane %v47, %v53
    %v56 = vadd.f32 %v36, %v54
    %57 = vst [vmem:[#allocation7] sm:$0xf] %v56
    // Predicated region
    $region18: #{tpu_custom_call.1} parent=1 // pred_check
      _
    $region19: #{tpu_custom_call.1} parent=1 // pred_check_branch
      %59 = sbr.rel (0) target = $region21
    $region20: #{tpu_custom_call.1} parent=1 // pred_region
      %s61 = ssub.s32 64, 64
      %62 = vsyncadd [#allocation4], %s61
      %s64 = sshll.u32 [#allocation7], 4
      %s65 = int_to_ptr.vmem [resolvable:$true] %s64
      %67 = dma.vmem_to_hbm [thread:$0]  %s65, 64, %s2, [#allocation4]
    $region21: #{tpu_custom_call.1} parent=1 // pred_fallthru
      _
    // Predicated region
    $region22: #{tpu_custom_call.1} parent=1 // pred_check
      _
    $region23: #{tpu_custom_call.1} parent=1 // pred_check_branch
      %69 = sbr.rel (0) target = $region25
    $region24: #{tpu_custom_call.1} parent=1 // pred_region
      %70 = dma.done [#allocation4], 64
    $region25: #{tpu_custom_call.1} parent=1 // pred_fallthru
      _
    %71 = vsyncpa [#allocation3], 1
    %72 = vsyncpa [#allocation6], 1
    %73 = vsyncpa [#allocation4], 1

</llo_original>
